<compile_context>
chip_gen: v7x
topology: tpu7x:2x2x1
jax: 0.10.0
libtpu: 0.0.40
codegen_flags: <defaults>
</compile_context>

<pallas_src>
import jax
import jax.numpy as jnp
from jax.experimental import pallas as pl
from jax.experimental.pallas import tpu as pltpu


def attn_dropout_kernel(x_ref, bias_ref, keep_ref, o_ref):
    # x_ref:    (gt, P, D)  block of packed head-groups, f32
    # bias_ref: (P, P)      additive pre-softmax mask: 0 within a head, -1e30 across heads
    # keep_ref: (gt, P, P)  dropout keep-scale, bf16, {0.0, 2.0} on the head-diagonal blocks
    x = x_ref[...]
    xb = x.astype(jnp.bfloat16)  # bf16 operands keep the MXU on its fast path

    # v1 = x @ x^T: contraction over D of both operands, batched over the group
    # dim -- no transpose is materialized (check with pl.lower_as_mlir if Mosaic
    # ever inserts a vxpose for much larger P).
    s = jnp.einsum("gqd,gkd->gqk", xb, xb, preferred_element_type=jnp.float32)
    s = s + bias_ref[...]  # suppress cross-head entries of the packed score tile

    # v2 = v1 / 1e-15, v3 = softmax(v2, last dim): subtract the max of the RAW
    # scores first, then scale; clamp the exp argument to [-80, 0] so exp never
    # sees huge-magnitude inputs (overflow / NaN safe on every backend).
    m = jnp.max(s, axis=-1, keepdims=True)
    z = jnp.maximum((s - m) * jnp.float32(1e15), jnp.float32(-80.0))
    e = jnp.exp(z)
    p = e / jnp.sum(e, axis=-1, keepdims=True)

    # v4 = dropout(v3, p=0.5): precomputed {0, 2} keep-scale (bf16, exact).
    pd = (p * keep_ref[...].astype(jnp.float32)).astype(jnp.bfloat16)

    # out = v4 @ x (batched over the group dim)
    out = jnp.einsum("gqk,gkd->gqd", pd, xb, preferred_element_type=jnp.float32)
    o_ref[...] = out.astype(o_ref.dtype)


def make_dropout_scale(key, shape, p=0.5):
    """Keep each element w.p. (1-p); kept elements are scaled by 1/(1-p)."""
    return jax.random.bernoulli(key, 1.0 - p, shape).astype(jnp.float32) / (1.0 - p)


def _pick_packing(BH, S):
    """Heads packed per matmul group so the packed seq P = k*S is ~lane width."""
    k = max(1, min(BH, max(1, 128 // S)))
    while BH % k:
        k -= 1
    return k


def _pick_groups_per_step(G, P, D, budget_bytes=12 * 1024 * 1024):
    """VMEM-budget-derived groups per grid step (double-buffered IO + f32 temps)."""
    per_group = (
        2 * (P * D * 4)      # x block (double-buffered)
        + 2 * (P * P * 2)    # bf16 keep-mask block (double-buffered)
        + 2 * (P * D * 4)    # output block (double-buffered)
        + 3 * (P * P * 4)    # in-kernel scores / exp / p f32 intermediates
    )
    gt = max(1, min(G, budget_bytes // per_group))
    # Prefer >= 4 grid steps so the auto-pipeline overlaps DMA with compute and
    # both v7x TensorCores get >= 2 iterations each.
    while gt > 1 and (G + gt - 1) // gt < min(4, G):
        gt -= 1
    while G % gt:
        gt -= 1
    return gt


def model_forward(x, keep_scale):
    """x: (B, H, S, D) f32; keep_scale: (B, H, S, S) f32 with values {0, 1/(1-p)}."""
    B, H, S, D = x.shape
    BH = B * H
    k = _pick_packing(BH, S)
    P = k * S
    G = BH // k

    # Pack k heads per group -> lane-dense (P, P) scores / softmax / dropout.
    xg = x.reshape(G, P, D)

    # Dropout keep-scale embedded on the head-diagonal blocks of the packed
    # (P, P) layout (cross-head probabilities are ~0 and masked to 0 anyway).
    km = keep_scale.reshape(G, k, S, S).astype(jnp.bfloat16)
    eye = jnp.eye(k, dtype=jnp.bfloat16)
    keep_packed = (km[:, :, :, None, :] * eye[None, :, None, :, None]).reshape(G, P, P)

    # Additive pre-softmax bias: 0 within a head, -1e30 across heads.
    hid = jnp.arange(P, dtype=jnp.int32) // S
    bias = jnp.where(hid[:, None] == hid[None, :], 0.0, -1e30).astype(jnp.float32)

    gt = _pick_groups_per_step(G, P, D)
    grid = G // gt

    out = pl.pallas_call(
        attn_dropout_kernel,
        out_shape=jax.ShapeDtypeStruct((G, P, D), x.dtype),
        grid=(grid,),
        in_specs=[
            pl.BlockSpec((gt, P, D), lambda i: (i, 0, 0)),
            pl.BlockSpec((P, P), lambda i: (0, 0)),
            pl.BlockSpec((gt, P, P), lambda i: (i, 0, 0)),
        ],
        out_specs=pl.BlockSpec((gt, P, D), lambda i: (i, 0, 0)),
        compiler_params=pltpu.CompilerParams(
            dimension_semantics=("parallel",),
            vmem_limit_bytes=32 * 1024 * 1024,
        ),
        cost_estimate=pl.CostEstimate(
            flops=4 * G * P * P * D,
            transcendentals=G * P * P,
            bytes_accessed=2 * G * P * D * 4 + G * P * P * 2,
        ),
    )(xg, bias, keep_packed)
    return out.reshape(B, H, S, D)


def reference(x, keep_scale):
    """Pure-JAX reference mirroring the kernel's dtype path and the same mask."""
    xb = x.astype(jnp.bfloat16)
    s = jnp.einsum("bhqd,bhkd->bhqk", xb, xb, preferred_element_type=jnp.float32)
    m = jnp.max(s, axis=-1, keepdims=True)
    z = jnp.maximum((s - m) * jnp.float32(1e15), jnp.float32(-80.0))
    e = jnp.exp(z)
    p = e / jnp.sum(e, axis=-1, keepdims=True)
    pd = (p * keep_scale).astype(jnp.bfloat16)
    return jnp.einsum("bhqk,bhkd->bhqd", pd, xb, preferred_element_type=jnp.float32)


if __name__ == "__main__":
    key = jax.random.PRNGKey(0)
    kx, kd = jax.random.split(key)

    # Small 4-D shapes consistent with the module (softmax dim=3 requires 4-D);
    # hidden=128 matches the module's last dim.  BH=64, S=8 -> 16 heads pack
    # into each 128-wide group, giving 4 lane-dense grid steps.
    B, H, S, D = 4, 16, 8, 128
    x = jax.random.normal(kx, (B, H, S, D), dtype=jnp.float32)
    keep_scale = make_dropout_scale(kd, (B, H, S, S), p=0.5)

    out = jax.block_until_ready(model_forward(x, keep_scale))

    assert out.shape == (B, H, S, D)
    assert bool(jnp.all(jnp.isfinite(out)))

    ref = reference(x, keep_scale)
    assert bool(jnp.allclose(out, ref, rtol=2e-2, atol=2e-2)), float(
        jnp.max(jnp.abs(out - ref))
    )

    print("KERNEL_OK")
</pallas_src>

<mosaic_0001>
module attributes {stable_mosaic.version = 11 : i64} {
  func.func @attn_dropout_kernel(%arg0: i32, %arg1: memref<1x128x128xf32, #tpu.memory_space<vmem>>, %arg2: memref<128x128xf32, #tpu.memory_space<vmem>>, %arg3: memref<1x128x128xbf16, #tpu.memory_space<vmem>>, %arg4: memref<1x128x128xf32, #tpu.memory_space<vmem>>) attributes {dimension_semantics = [#tpu.dimension_semantics<parallel>], iteration_bounds = array<i64: 4>, scalar_prefetch = 0 : i64, scratch_operands = 0 : i64, tpu.core_type = #tpu.core_type<tc>, window_params = [{transform_indices = @transform_0, window_bounds = array<i64: 1, 128, 128>}, {pipeline_mode = #tpu.pipeline_mode<synchronous>, transform_indices = @transform_1, window_bounds = array<i64: 128, 128>}, {transform_indices = @transform_2, window_bounds = array<i64: 1, 128, 128>}, {transform_indices = @transform_3, window_bounds = array<i64: 1, 128, 128>}]} {
    %c0 = arith.constant 0 : index
    %c0_0 = arith.constant 0 : index
    %c0_1 = arith.constant 0 : index
    %0 = vector.load %arg1[%c0, %c0_0, %c0_1] : memref<1x128x128xf32, #tpu.memory_space<vmem>>, vector<1x128x128xf32>
    %1 = arith.truncf %0 : vector<1x128x128xf32> to vector<1x128x128xbf16>
    "tpu.trace_start"() <{level = 10 : i32, message = "gqd,gkd->gqk"}> : () -> ()
    %cst = arith.constant dense<0.000000e+00> : vector<1x128x128xf32>
    %2 = tpu.matmul %1, %1, %cst {dimension_numbers = #tpu.dot_dimension_numbers<[2], [2], [1], [1], [0, 0, 0, 1, 1, 1], [0], [0]>} : vector<1x128x128xbf16>, vector<1x128x128xbf16>, vector<1x128x128xf32> -> vector<1x128x128xf32>
    "tpu.trace_stop"() : () -> ()
    %c0_2 = arith.constant 0 : index
    %c0_3 = arith.constant 0 : index
    %3 = vector.load %arg2[%c0_2, %c0_3] : memref<128x128xf32, #tpu.memory_space<vmem>>, vector<128x128xf32>
    %4 = vector.shape_cast %3 : vector<128x128xf32> to vector<1x128x128xf32>
    %5 = arith.addf %2, %4 : vector<1x128x128xf32>
    %cst_4 = arith.constant dense<0xFF800000> : vector<1x128xf32>
    %6 = vector.multi_reduction <maximumf>, %5, %cst_4 [2] : vector<1x128x128xf32> to vector<1x128xf32>
    %7 = vector.shape_cast %6 : vector<1x128xf32> to vector<1x128x1xf32>
    %8 = vector.broadcast %7 : vector<1x128x1xf32> to vector<1x128x128xf32>
    %9 = arith.subf %5, %8 : vector<1x128x128xf32>
    %cst_5 = arith.constant 9.99999986E+14 : f32
    %10 = vector.broadcast %cst_5 : f32 to vector<1x128x128xf32>
    %11 = arith.mulf %9, %10 : vector<1x128x128xf32>
    %cst_6 = arith.constant -8.000000e+01 : f32
    %12 = vector.broadcast %cst_6 : f32 to vector<1x128x128xf32>
    %13 = arith.maximumf %11, %12 : vector<1x128x128xf32>
    %14 = math.exp %13 : vector<1x128x128xf32>
    %cst_7 = arith.constant dense<0.000000e+00> : vector<1x128xf32>
    %15 = vector.multi_reduction <add>, %14, %cst_7 [2] : vector<1x128x128xf32> to vector<1x128xf32>
    %16 = vector.shape_cast %15 : vector<1x128xf32> to vector<1x128x1xf32>
    %17 = vector.broadcast %16 : vector<1x128x1xf32> to vector<1x128x128xf32>
    %18 = arith.divf %14, %17 : vector<1x128x128xf32>
    %c0_8 = arith.constant 0 : index
    %c0_9 = arith.constant 0 : index
    %c0_10 = arith.constant 0 : index
    %19 = vector.load %arg3[%c0_8, %c0_9, %c0_10] : memref<1x128x128xbf16, #tpu.memory_space<vmem>>, vector<1x128x128xbf16>
    %20 = arith.extf %19 : vector<1x128x128xbf16> to vector<1x128x128xf32>
    %21 = arith.mulf %18, %20 : vector<1x128x128xf32>
    %22 = arith.truncf %21 : vector<1x128x128xf32> to vector<1x128x128xbf16>
    "tpu.trace_start"() <{level = 10 : i32, message = "gqk,gkd->gqd"}> : () -> ()
    %cst_11 = arith.constant dense<0.000000e+00> : vector<1x128x128xf32>
    %23 = tpu.matmul %22, %1, %cst_11 {dimension_numbers = #tpu.dot_dimension_numbers<[2], [1], [1], [2], [0, 0, 0, 1, 1, 2], [0], [0]>} : vector<1x128x128xbf16>, vector<1x128x128xbf16>, vector<1x128x128xf32> -> vector<1x128x128xf32>
    "tpu.trace_stop"() : () -> ()
    %c0_12 = arith.constant 0 : index
    %c0_13 = arith.constant 0 : index
    %c0_14 = arith.constant 0 : index
    %24 = vector.load %arg4[%c0_12, %c0_13, %c0_14] : memref<1x128x128xf32, #tpu.memory_space<vmem>>, vector<1x128x128xf32>
    tpu.vector_store %arg4[%c0_12, %c0_13, %c0_14], %23 {strides = array<i32>} : memref<1x128x128xf32, #tpu.memory_space<vmem>>, vector<1x128x128xf32>,
    return
  }
  func.func @transform_0(%arg0: i32) -> (i32, i32, i32) {
    %c0_i32 = arith.constant 0 : i32
    %c0_i32_0 = arith.constant 0 : i32
    %c0_i32_1 = arith.constant 0 : i32
    return %arg0, %c0_i32, %c0_i32_0 : i32, i32, i32
  }
  func.func @transform_1(%arg0: i32) -> (i32, i32) {
    %c0_i32 = arith.constant 0 : i32
    %c0_i32_0 = arith.constant 0 : i32
    %c0_i32_1 = arith.constant 0 : i32
    return %c0_i32, %c0_i32_0 : i32, i32
  }
  func.func @transform_2(%arg0: i32) -> (i32, i32, i32) {
    %c0_i32 = arith.constant 0 : i32
    %c0_i32_0 = arith.constant 0 : i32
    %c0_i32_1 = arith.constant 0 : i32
    return %arg0, %c0_i32, %c0_i32_0 : i32, i32, i32
  }
  func.func @transform_3(%arg0: i32) -> (i32, i32, i32) {
    %c0_i32 = arith.constant 0 : i32
    %c0_i32_0 = arith.constant 0 : i32
    %c0_i32_1 = arith.constant 0 : i32
    return %arg0, %c0_i32, %c0_i32_0 : i32, i32, i32
  }
}

</mosaic_0001>

<llo_original>
// kernel: tpu_custom_call.1
$region0: #{tpu_custom_call.1}
  #allocation0 [shape = 'u32[]', space=smem, size = 0x4, offset = 0x4, fixed_abs, tag = 'smem constant byte address 0x4 - core index']
  #allocation1 [shape = 'u32[144,128]{1,0:T(1,128)}', space=vmem, size = 0x12000, scoped, tag = 'internal scratch']
  %s0 = inlined_call_operand.hbm [shape: f32[4,128,128], index: 0, kind: input, shape index: {}]
  %s1 = inlined_call_operand.hbm [shape: f32[128,128], index: 1, kind: input, shape index: {}]
  %s2 = inlined_call_operand.hbm [shape: bf16[4,128,128], index: 2, kind: input, shape index: {}]
  %s3 = inlined_call_operand.hbm [shape: f32[4,128,128], index: 3, kind: output, shape index: {}]
  %s4 = sld [smem:[#allocation0]]
  $region57: #{tpu_custom_call.1} parent=0
    _
  %s6 = ssub.s32 1, %s4
  %s7 = scalar_select 0, %s6, %s4
  $region1: #{tpu_custom_call.1} parent=0
    #allocation2 [shape = 'u8[131072]{0}', space=vmem, size = 0x20000, scoped, tag = 'input window, operand 0']
    #allocation3 [shape = 's32[2]{0}', space=sflag, size = 0x8, scoped, tag = 'scoped memory for tpu_custom_call.1']
    #allocation4 [shape = 's32[2]{0}', space=sflag, size = 0x8, scoped, tag = 'scoped memory for tpu_custom_call.1']
    #allocation5 [shape = 'u8[65536]{0}', space=vmem, size = 0x10000, scoped, tag = 'input window, operand 1, single buffered']
    #allocation6 [shape = 's32[1]{0}', space=sflag, size = 0x4, scoped, tag = 'scoped memory for tpu_custom_call.1']
    #allocation7 [shape = 'u8[65536]{0}', space=vmem, size = 0x10000, scoped, tag = 'input window, operand 2']
    #allocation8 [shape = 'u8[131072]{0}', space=vmem, size = 0x20000, scoped, tag = 'output window, operand 0']
    %8 = vsyncpa [#allocation3], 0
    %s9 = scalar_lea.sflag [#allocation3], 1
    %10 = vsyncpa %s9, 0
    %11 = vsyncpa [#allocation6], 0
    %12 = vsyncpa [#allocation4], 0
    %s13 = scalar_lea.sflag [#allocation4], 1
    %14 = vsyncpa %s13, 0
    loop: start=0, step=1, limit=6
    $region2: #{tpu_custom_call.1} parent=1 // loop_pre_header
      _
    $region3: #{tpu_custom_call.1} parent=1 // loop_header
      %s16 = sphi 0, %s20
      %p17 = scmp.ge.s32.totalorder %s16, 6
      %s26 = sphi 0, %s28
      %s29 = sphi 0, %s26
      %s30 = sphi 0, %s29
      %s46 = sphi 0, %s30
      %s50 = sphi 0, %s50
      %s52 = sphi 0, %s50
      %s53 = sphi 0, %s52
      %s67 = sphi 0, %s53
      %s73 = sphi 0, %s75
      %s76 = sphi 0, %s73
      %s77 = sphi 0, %s76
      %s93 = sphi 0, %s77
      %s99 = sphi 0, %s101
      %s102 = sphi 0, %s99
      %s103 = sphi 0, %s102
      %s119 = sphi 0, %s103
    $region4: #{tpu_custom_call.1} parent=1 // loop_header_branch
      %19 = sbr.rel (%p17) target = $region8
    $region5: #{tpu_custom_call.1} parent=1 // loop_body
      %s21 = ssub.s32 %s16, 1
      %s22 = ssub.s32 %s16, 2
      %s23 = sadd.s32 %s16, 1
      %s24 = ssub.s32 %s16, %s23
      %p25 = scmp.eq.s32.totalorder %s24, 0
      %s27 = sadd.s32 %s26, 1
      %s28 = scalar_select %p25, %s26, %s27
      %p31 = pneg %p25
      %p32 = scmp.eq.s32.totalorder %s16, 3
      %p33 = por %p31, %p32
      %p34 = scmp.ne.s32.totalorder %s26, %s29
      %p35 = scmp.eq.s32.totalorder %s16, 0
      %p36 = por %p34, %p35
      %p37 = scmp.ne.s32.totalorder %s26, %s29
      %p38 = scmp.eq.s32.totalorder %s21, 3
      %p39 = por %p37, %p38
      %p40 = scmp.ne.s32.totalorder %s29, %s30
      %p41 = scmp.eq.s32.totalorder %s21, 0
      %p42 = por %p40, %p41
      %p43 = scmp.ne.s32.totalorder %s29, %s30
      %p44 = scmp.eq.s32.totalorder %s22, 3
      %p45 = por %p43, %p44
      %p47 = scmp.ne.s32.totalorder %s30, %s46
      %p48 = scmp.eq.s32.totalorder %s22, 0
      %p49 = por %p47, %p48
      %s51 = sadd.s32 %s50, 1
      %p54 = scmp.eq.s32.totalorder %s16, 3
      %p55 = scmp.ne.s32.totalorder %s50, %s52
      %p56 = scmp.eq.s32.totalorder %s16, 0
      %p57 = por %p55, %p56
      %p58 = scmp.ne.s32.totalorder %s50, %s52
      %p59 = scmp.eq.s32.totalorder %s21, 3
      %p60 = por %p58, %p59
      %p61 = scmp.ne.s32.totalorder %s52, %s53
      %p62 = scmp.eq.s32.totalorder %s21, 0
      %p63 = por %p61, %p62
      %p64 = scmp.ne.s32.totalorder %s52, %s53
      %p65 = scmp.eq.s32.totalorder %s22, 3
      %p66 = por %p64, %p65
      %p68 = scmp.ne.s32.totalorder %s53, %s67
      %p69 = scmp.eq.s32.totalorder %s22, 0
      %p70 = por %p68, %p69
      %s71 = ssub.s32 %s16, %s23
      %p72 = scmp.eq.s32.totalorder %s71, 0
      %s74 = sadd.s32 %s73, 1
      %s75 = scalar_select %p72, %s73, %s74
      %p78 = pneg %p72
      %p79 = scmp.eq.s32.totalorder %s16, 3
      %p80 = por %p78, %p79
      %p81 = scmp.ne.s32.totalorder %s73, %s76
      %p82 = scmp.eq.s32.totalorder %s16, 0
      %p83 = por %p81, %p82
      %p84 = scmp.ne.s32.totalorder %s73, %s76
      %p85 = scmp.eq.s32.totalorder %s21, 3
      %p86 = por %p84, %p85
      %p87 = scmp.ne.s32.totalorder %s76, %s77
      %p88 = scmp.eq.s32.totalorder %s21, 0
      %p89 = por %p87, %p88
      %p90 = scmp.ne.s32.totalorder %s76, %s77
      %p91 = scmp.eq.s32.totalorder %s22, 3
      %p92 = por %p90, %p91
      %p94 = scmp.ne.s32.totalorder %s77, %s93
      %p95 = scmp.eq.s32.totalorder %s22, 0
      %p96 = por %p94, %p95
      %s97 = ssub.s32 %s16, %s23
      %p98 = scmp.eq.s32.totalorder %s97, 0
      %s100 = sadd.s32 %s99, 1
      %s101 = scalar_select %p98, %s99, %s100
      %p104 = pneg %p98
      %p105 = scmp.eq.s32.totalorder %s16, 3
      %p106 = por %p104, %p105
      %p107 = scmp.ne.s32.totalorder %s99, %s102
      %p108 = scmp.eq.s32.totalorder %s16, 0
      %p109 = por %p107, %p108
      %p110 = scmp.ne.s32.totalorder %s99, %s102
      %p111 = scmp.eq.s32.totalorder %s21, 3
      %p112 = por %p110, %p111
      %p113 = scmp.ne.s32.totalorder %s102, %s103
      %p114 = scmp.eq.s32.totalorder %s21, 0
      %p115 = por %p113, %p114
      %p116 = scmp.ne.s32.totalorder %s102, %s103
      %p117 = scmp.eq.s32.totalorder %s22, 3
      %p118 = por %p116, %p117
      %p120 = scmp.ne.s32.totalorder %s103, %s119
      %p121 = scmp.eq.s32.totalorder %s22, 0
      %p122 = por %p120, %p121
      %p123 = scmp.le.s32.totalorder 1, %s16
      %p124 = scmp.lt.s32.totalorder %s16, 5
      %p125 = pnand %p123, %p124
      %p126 = pneg %p125
      // Predicated region
      $region9: #{tpu_custom_call.1} parent=5 // pred_check
        _
      $region10: #{tpu_custom_call.1} parent=5 // pred_check_branch
        %128 = sbr.rel (%p125) target = $region12
      $region11: #{tpu_custom_call.1} parent=5 // pred_region
        %s129 = ssub.s32 %s16, 1
        // Predicated region
        $region13: #{tpu_custom_call.1} parent=11 // pred_check
          %p130 = pneg %p63
        $region14: #{tpu_custom_call.1} parent=11 // pred_check_branch
          %132 = sbr.rel (%p130) target = $region16
        $region15: #{tpu_custom_call.1} parent=11 // pred_region
          %s134 = ssub.s32 2048, 2048
          %135 = vsyncadd [#allocation6], %s134
          %s136 = sshll.u32 [#allocation5], 4
          %s137 = int_to_ptr.vmem [resolvable:$true] %s136
          %142 = dma.hbm_to_vmem [thread:$0]  %s1, 2048, %s137, [#allocation6], 128, 128, 8
        $region16: #{tpu_custom_call.1} parent=11 // pred_fallthru
          _
      $region12: #{tpu_custom_call.1} parent=5 // pred_fallthru
        _
      %p143 = scmp.lt.s32.totalorder %s16, 4
      // Predicated region
      $region17: #{tpu_custom_call.1} parent=5 // pred_check
        %p144 = pneg %p143
      $region18: #{tpu_custom_call.1} parent=5 // pred_check_branch
        %146 = sbr.rel (%p144) target = $region20
      $region19: #{tpu_custom_call.1} parent=5 // pred_region
        // Predicated region
        $region21: #{tpu_custom_call.1} parent=19 // pred_check
          %p147 = pneg %p36
        $region22: #{tpu_custom_call.1} parent=19 // pred_check_branch
          %149 = sbr.rel (%p147) target = $region24
        $region23: #{tpu_custom_call.1} parent=19 // pred_region
          %s150 = sand.u32 %s16, 1
          %s151 = scalar_lea.sflag [#allocation3], %s150
          %s152 = sand.u32 %s26, 1
          %s153 = smul.addr %s152, 128
          %s154 = scalar_lea.vmem [#allocation2], %s153
          %s156 = ssub.s32 2048, 2048
          %157 = vsyncadd %s151, %s156
          %s158 = smul.addr %s16, 16
          %s159 = smul.addr %s158, 128
          %s160 = scalar_lea.hbm %s0, %s159
          %s161 = sshll.u32 %s154, 4
          %s162 = int_to_ptr.vmem [resolvable:$true] %s161
          %167 = dma.hbm_to_vmem [thread:$0]  %s160, 2048, %s162, %s151, 128, 128, 8
        $region24: #{tpu_custom_call.1} parent=19 // pred_fallthru
          _
        // Predicated region
        $region25: #{tpu_custom_call.1} parent=19 // pred_check
          %p168 = pneg %p83
        $region26: #{tpu_custom_call.1} parent=19 // pred_check_branch
          %170 = sbr.rel (%p168) target = $region28
        $region27: #{tpu_custom_call.1} parent=19 // pred_region
          %s171 = sand.u32 %s16, 1
          %s172 = scalar_lea.sflag [#allocation3], %s171
          %s173 = sand.u32 %s73, 1
          %s174 = smul.addr %s173, 64
          %s175 = scalar_lea.vmem [#allocation7], %s174
          %s177 = ssub.s32 1024, 1024
          %178 = vsyncadd %s172, %s177
          %s179 = smul.addr %s16, 16
          %s180 = smul.addr %s179, 64
          %s181 = scalar_lea.hbm %s2, %s180
          %s182 = sshll.u32 %s175, 4
          %s183 = int_to_ptr.vmem [resolvable:$true] %s182
          %188 = dma.hbm_to_vmem [thread:$0]  %s181, 1024, %s183, %s172, 64, 64, 4
        $region28: #{tpu_custom_call.1} parent=19 // pred_fallthru
          _
      $region20: #{tpu_custom_call.1} parent=5 // pred_fallthru
        _
      %p189 = scmp.le.s32.totalorder 1, %s16
      %p190 = scmp.lt.s32.totalorder %s16, 5
      %p191 = pnand %p189, %p190
      %p192 = pneg %p191
      // Predicated region
      $region29: #{tpu_custom_call.1} parent=5 // pred_check
        _
      $region30: #{tpu_custom_call.1} parent=5 // pred_check_branch
        %194 = sbr.rel (%p191) target = $region32
      $region31: #{tpu_custom_call.1} parent=5 // pred_region
        %s195 = ssub.s32 %s16, 1
        %s196 = sand.u32 %s21, 1
        %s197 = scalar_lea.sflag [#allocation3], %s196
        %s198 = sand.u32 %s29, 1
        %s199 = smul.addr %s198, 128
        %s200 = scalar_lea.vmem [#allocation2], %s199
        // Predicated region
        $region33: #{tpu_custom_call.1} parent=31 // pred_check
          %p201 = pneg %p42
        $region34: #{tpu_custom_call.1} parent=31 // pred_check_branch
          %203 = sbr.rel (%p201) target = $region36
        $region35: #{tpu_custom_call.1} parent=31 // pred_region
          %204 = dma.done %s197, 2048
        $region36: #{tpu_custom_call.1} parent=31 // pred_fallthru
          _
        // Predicated region
        $region37: #{tpu_custom_call.1} parent=31 // pred_check
          %p205 = pneg %p63
        $region38: #{tpu_custom_call.1} parent=31 // pred_check_branch
          %207 = sbr.rel (%p205) target = $region40
        $region39: #{tpu_custom_call.1} parent=31 // pred_region
          %208 = dma.done [#allocation6], 2048
        $region40: #{tpu_custom_call.1} parent=31 // pred_fallthru
          _
        %s209 = sand.u32 %s21, 1
        %s210 = scalar_lea.sflag [#allocation3], %s209
        %s211 = sand.u32 %s76, 1
        %s212 = smul.addr %s211, 64
        %s213 = scalar_lea.vmem [#allocation7], %s212
        // Predicated region
        $region41: #{tpu_custom_call.1} parent=31 // pred_check
          %p214 = pneg %p89
        $region42: #{tpu_custom_call.1} parent=31 // pred_check_branch
          %216 = sbr.rel (%p214) target = $region44
        $region43: #{tpu_custom_call.1} parent=31 // pred_region
          %217 = dma.done %s210, 1024
        $region44: #{tpu_custom_call.1} parent=31 // pred_fallthru
          _
        %s218 = sand.u32 %s21, 1
        %s219 = scalar_lea.sflag [#allocation3], %s218
        %s220 = sand.u32 %s29, 1
        %s221 = smul.addr %s220, 128
        %s222 = scalar_lea.vmem [#allocation2], %s221
        %p223 = pneg %p42
        %p224 = pneg %p39
        %p225 = pneg %p63
        %p226 = pneg %p60
        %s227 = sand.u32 %s21, 1
        %s228 = scalar_lea.sflag [#allocation3], %s227
        %s229 = sand.u32 %s76, 1
        %s230 = smul.addr %s229, 64
        %s231 = scalar_lea.vmem [#allocation7], %s230
        %p232 = pneg %p89
        %p233 = pneg %p86
        %p234 = pneg %p115
        %p235 = pneg %p112
        %s236 = sand.u32 %s102, 1
        %s237 = scalar_lea.sflag [#allocation4], %s236
        %s238 = sand.u32 %s102, 1
        %s239 = smul.addr %s238, 128
        %s240 = scalar_lea.vmem [#allocation8], %s239
        %v242 = vld [vmem:[%s200] sm:$0xff]
        %v243 = vld [vmem:[%s200 + $0x8] sm:$0xff]
        %v244 = vld [vmem:[%s200 + $0x10] sm:$0xff]
        %v245 = vld [vmem:[%s200 + $0x18] sm:$0xff]
        %v246 = vld [vmem:[%s200 + $0x20] sm:$0xff]
        %v247 = vld [vmem:[%s200 + $0x28] sm:$0xff]
        %v248 = vld [vmem:[%s200 + $0x30] sm:$0xff]
        %v249 = vld [vmem:[%s200 + $0x38] sm:$0xff]
        %v250 = vld [vmem:[%s200 + $0x40] sm:$0xff]
        %v251 = vld [vmem:[%s200 + $0x48] sm:$0xff]
        %v252 = vld [vmem:[%s200 + $0x50] sm:$0xff]
        %v253 = vld [vmem:[%s200 + $0x58] sm:$0xff]
        %v254 = vld [vmem:[%s200 + $0x60] sm:$0xff]
        %v255 = vld [vmem:[%s200 + $0x68] sm:$0xff]
        %v256 = vld [vmem:[%s200 + $0x70] sm:$0xff]
        %v257 = vld [vmem:[%s200 + $0x78] sm:$0xff]
        %v258 = vpack.c.bf16 %v243, %v242
        %v259 = vpack.c.bf16 %v245, %v244
        %v260 = vpack.c.bf16 %v247, %v246
        %v261 = vpack.c.bf16 %v249, %v248
        %v262 = vpack.c.bf16 %v251, %v250
        %v263 = vpack.c.bf16 %v253, %v252
        %v264 = vpack.c.bf16 %v255, %v254
        %v265 = vpack.c.bf16 %v257, %v256
        %v266 = vld [vmem:[#allocation5] sm:$0xff]
        %v267 = vld [vmem:[#allocation5 + $0x8] sm:$0xff]
        %v268 = vld [vmem:[#allocation5 + $0x10] sm:$0xff]
        %v269 = vld [vmem:[#allocation5 + $0x18] sm:$0xff]
        %v270 = vld [vmem:[#allocation5 + $0x20] sm:$0xff]
        %v271 = vld [vmem:[#allocation5 + $0x28] sm:$0xff]
        %v272 = vld [vmem:[#allocation5 + $0x30] sm:$0xff]
        %v273 = vld [vmem:[#allocation5 + $0x38] sm:$0xff]
        %v274 = vld [vmem:[#allocation5 + $0x40] sm:$0xff]
        %v275 = vld [vmem:[#allocation5 + $0x48] sm:$0xff]
        %v276 = vld [vmem:[#allocation5 + $0x50] sm:$0xff]
        %v277 = vld [vmem:[#allocation5 + $0x58] sm:$0xff]
        %v278 = vld [vmem:[#allocation5 + $0x60] sm:$0xff]
        %v279 = vld [vmem:[#allocation5 + $0x68] sm:$0xff]
        %v280 = vld [vmem:[#allocation5 + $0x70] sm:$0xff]
        %v281 = vld [vmem:[#allocation5 + $0x78] sm:$0xff]
        %282 = vmatprep.subr.bf16.mxu0 0
        %283 = vmatpush1.bf16.xpose.msra.mxu0 %v258
        %284 = vmatprep.subr.bf16.mxu0 0
        %285 = vmatpush1.bf16.xpose.msra.mxu0 %v259
        %286 = vmatprep.subr.bf16.mxu0 0
        %287 = vmatpush1.bf16.xpose.msra.mxu0 %v260
        %288 = vmatprep.subr.bf16.mxu0 0
        %289 = vmatpush1.bf16.xpose.msra.mxu0 %v261
        %290 = vmatprep.subr.bf16.mxu0 0
        %291 = vmatpush1.bf16.xpose.msra.mxu0 %v262
        %292 = vmatprep.subr.bf16.mxu0 0
        %293 = vmatpush1.bf16.xpose.msra.mxu0 %v263
        %294 = vmatprep.subr.bf16.mxu0 0
        %295 = vmatpush1.bf16.xpose.msra.mxu0 %v264
        %296 = vmatprep.subr.bf16.mxu0 0
        %297 = vmatpush1.bf16.xpose.msra.mxu0 %v265
        %298 = vmatprep.subr.bf16.mxu0 0
        %299 = vmatpush1.bf16.xpose.msra.mxu0 0
        %300 = vmatprep.subr.bf16.mxu0 0
        %301 = vmatpush1.bf16.xpose.msra.mxu0 0
        %302 = vmatprep.subr.bf16.mxu0 0
        %303 = vmatpush1.bf16.xpose.msra.mxu0 0
        %304 = vmatprep.subr.bf16.mxu0 0
        %305 = vmatpush1.bf16.xpose.msra.mxu0 0
        %306 = vmatprep.subr.bf16.mxu0 0
        %307 = vmatpush1.bf16.xpose.msra.mxu0 0
        %308 = vmatprep.subr.bf16.mxu0 0
        %309 = vmatpush1.bf16.xpose.msra.mxu0 0
        %310 = vmatprep.subr.bf16.mxu0 0
        %311 = vmatpush1.bf16.xpose.msra.mxu0 0
        %312 = vmatprep.subr.bf16.mxu0 0
        %313 = vmatpush1.bf16.xpose.msra.mxu0 0
        %314 = vmatprep.mubr.bf16.mxu0 0
        %315 = vmatmul.mubr.bf16.gmra.mrb[0].mxu0 %v258
        %v316 = vpop.f32.mrb[0].mxu0
        %v317 = vadd.f32 %v266, %v316
        %v318 = vpop.f32.mrb[0].mxu0
        %v319 = vpop.f32.mrb[0].mxu0
        %v320 = vadd.f32 %v267, %v319
        %v321 = vpop.f32.mrb[0].mxu0
        %322 = vmatprep.mubr.bf16.mxu0 0
        %323 = vmatmul.mubr.bf16.gmra.mrb[0].mxu0 %v259
        %v324 = vpop.f32.mrb[0].mxu0
        %v325 = vadd.f32 %v268, %v324
        %v326 = vpop.f32.mrb[0].mxu0
        %v327 = vpop.f32.mrb[0].mxu0
        %v328 = vadd.f32 %v269, %v327
        %v329 = vpop.f32.mrb[0].mxu0
        %330 = vmatprep.mubr.bf16.mxu0 0
        %331 = vmatmul.mubr.bf16.gmra.mrb[0].mxu0 %v260
        %v332 = vpop.f32.mrb[0].mxu0
        %v333 = vadd.f32 %v270, %v332
        %v334 = vpop.f32.mrb[0].mxu0
        %v335 = vpop.f32.mrb[0].mxu0
        %v336 = vadd.f32 %v271, %v335
        %v337 = vpop.f32.mrb[0].mxu0
        %338 = vmatprep.mubr.bf16.mxu0 0
        %339 = vmatmul.mubr.bf16.gmra.mrb[0].mxu0 %v261
        %v340 = vpop.f32.mrb[0].mxu0
        %v341 = vadd.f32 %v272, %v340
        %v342 = vpop.f32.mrb[0].mxu0
        %v343 = vpop.f32.mrb[0].mxu0
        %v344 = vadd.f32 %v273, %v343
        %v345 = vpop.f32.mrb[0].mxu0
        %346 = vmatprep.mubr.bf16.mxu0 0
        %347 = vmatmul.mubr.bf16.gmra.mrb[0].mxu0 %v262
        %v348 = vpop.f32.mrb[0].mxu0
        %v349 = vadd.f32 %v274, %v348
        %v350 = vpop.f32.mrb[0].mxu0
        %v351 = vpop.f32.mrb[0].mxu0
        %v352 = vadd.f32 %v275, %v351
        %v353 = vpop.f32.mrb[0].mxu0
        %354 = vmatprep.mubr.bf16.mxu0 0
        %355 = vmatmul.mubr.bf16.gmra.mrb[0].mxu0 %v263
        %v356 = vpop.f32.mrb[0].mxu0
        %v357 = vadd.f32 %v276, %v356
        %v358 = vpop.f32.mrb[0].mxu0
        %v359 = vpop.f32.mrb[0].mxu0
        %v360 = vadd.f32 %v277, %v359
        %v361 = vpop.f32.mrb[0].mxu0
        %362 = vmatprep.mubr.bf16.mxu0 0
        %363 = vmatmul.mubr.bf16.gmra.mrb[0].mxu0 %v264
        %v364 = vpop.f32.mrb[0].mxu0
        %v365 = vadd.f32 %v278, %v364
        %v366 = vpop.f32.mrb[0].mxu0
        %v367 = vpop.f32.mrb[0].mxu0
        %v368 = vadd.f32 %v279, %v367
        %v369 = vpop.f32.mrb[0].mxu0
        %370 = vmatprep.mubr.bf16.mxu0 0
        %371 = vmatmul.mubr.bf16.gmra.mrb[0].mxu0 %v265
        %v372 = vpop.f32.mrb[0].mxu0
        %v373 = vadd.f32 %v280, %v372
        %v374 = vpop.f32.mrb[0].mxu0
        %v375 = vpop.f32.mrb[0].mxu0
        %v376 = vadd.f32 %v281, %v375
        %v377 = vpop.f32.mrb[0].mxu0
        %378 = vdwg.mxu0
        %379 = vmax.xlane.f32.xlu0 %v317
        %v380 = vpop.xlane.xlu0 %379
        %381 = vmax.xlane.f32.xlu0 %v320
        %v382 = vpop.xlane.xlu0 %381
        %383 = vmax.xlane.f32.xlu0 %v325
        %v384 = vpop.xlane.xlu0 %383
        %385 = vmax.xlane.f32.xlu0 %v328
        %v386 = vpop.xlane.xlu0 %385
        %387 = vmax.xlane.f32.xlu0 %v333
        %v388 = vpop.xlane.xlu0 %387
        %389 = vmax.xlane.f32.xlu0 %v336
        %v390 = vpop.xlane.xlu0 %389
        %391 = vmax.xlane.f32.xlu0 %v341
        %v392 = vpop.xlane.xlu0 %391
        %393 = vmax.xlane.f32.xlu0 %v344
        %v394 = vpop.xlane.xlu0 %393
        %395 = vmax.xlane.f32.xlu0 %v349
        %v396 = vpop.xlane.xlu0 %395
        %397 = vmax.xlane.f32.xlu0 %v352
        %v398 = vpop.xlane.xlu0 %397
        %399 = vmax.xlane.f32.xlu0 %v357
        %v400 = vpop.xlane.xlu0 %399
        %401 = vmax.xlane.f32.xlu0 %v360
        %v402 = vpop.xlane.xlu0 %401
        %403 = vmax.xlane.f32.xlu0 %v365
        %v404 = vpop.xlane.xlu0 %403
        %405 = vmax.xlane.f32.xlu0 %v368
        %v406 = vpop.xlane.xlu0 %405
        %407 = vmax.xlane.f32.xlu0 %v373
        %v408 = vpop.xlane.xlu0 %407
        %409 = vmax.xlane.f32.xlu0 %v376
        %v410 = vpop.xlane.xlu0 %409
        %v411 = vsub.f32 %v317, %v380
        %v412 = vsub.f32 %v320, %v382
        %v413 = vsub.f32 %v325, %v384
        %v414 = vsub.f32 %v328, %v386
        %v415 = vsub.f32 %v333, %v388
        %v416 = vsub.f32 %v336, %v390
        %v417 = vsub.f32 %v341, %v392
        %v418 = vsub.f32 %v344, %v394
        %v419 = vsub.f32 %v349, %v396
        %v420 = vsub.f32 %v352, %v398
        %v421 = vsub.f32 %v357, %v400
        %v422 = vsub.f32 %v360, %v402
        %v423 = vsub.f32 %v365, %v404
        %v424 = vsub.f32 %v368, %v406
        %v425 = vsub.f32 %v373, %v408
        %v426 = vsub.f32 %v376, %v410
        %v427 = vmul.f32 %v411, 1e+15
        %v428 = vmul.f32 %v412, 1e+15
        %v429 = vmul.f32 %v413, 1e+15
        %v430 = vmul.f32 %v414, 1e+15
        %v431 = vmul.f32 %v415, 1e+15
        %v432 = vmul.f32 %v416, 1e+15
        %v433 = vmul.f32 %v417, 1e+15
        %v434 = vmul.f32 %v418, 1e+15
        %v435 = vmul.f32 %v419, 1e+15
        %v436 = vmul.f32 %v420, 1e+15
        %v437 = vmul.f32 %v421, 1e+15
        %v438 = vmul.f32 %v422, 1e+15
        %v439 = vmul.f32 %v423, 1e+15
        %v440 = vmul.f32 %v424, 1e+15
        %v441 = vmul.f32 %v425, 1e+15
        %v442 = vmul.f32 %v426, 1e+15
        %v443 = vmax.f32 %v427, -80.0
        %v444 = vmax.f32 %v428, -80.0
        %v445 = vmax.f32 %v429, -80.0
        %v446 = vmax.f32 %v430, -80.0
        %v447 = vmax.f32 %v431, -80.0
        %v448 = vmax.f32 %v432, -80.0
        %v449 = vmax.f32 %v433, -80.0
        %v450 = vmax.f32 %v434, -80.0
        %v451 = vmax.f32 %v435, -80.0
        %v452 = vmax.f32 %v436, -80.0
        %v453 = vmax.f32 %v437, -80.0
        %v454 = vmax.f32 %v438, -80.0
        %v455 = vmax.f32 %v439, -80.0
        %v456 = vmax.f32 %v440, -80.0
        %v457 = vmax.f32 %v441, -80.0
        %v458 = vmax.f32 %v442, -80.0
        %v459 = vmul.f32 %v443, 1.442695
        %v460 = vpow.pop %v459
        %v461 = vmul.f32 %v444, 1.442695
        %v462 = vpow.pop %v461
        %v463 = vmul.f32 %v445, 1.442695
        %v464 = vpow.pop %v463
        %v465 = vmul.f32 %v446, 1.442695
        %v466 = vpow.pop %v465
        %v467 = vmul.f32 %v447, 1.442695
        %v468 = vpow.pop %v467
        %v469 = vmul.f32 %v448, 1.442695
        %v470 = vpow.pop %v469
        %v471 = vmul.f32 %v449, 1.442695
        %v472 = vpow.pop %v471
        %v473 = vmul.f32 %v450, 1.442695
        %v474 = vpow.pop %v473
        %v475 = vmul.f32 %v451, 1.442695
        %v476 = vpow.pop %v475
        %v477 = vmul.f32 %v452, 1.442695
        %v478 = vpow.pop %v477
        %v479 = vmul.f32 %v453, 1.442695
        %v480 = vpow.pop %v479
        %v481 = vmul.f32 %v454, 1.442695
        %v482 = vpow.pop %v481
        %v483 = vmul.f32 %v455, 1.442695
        %v484 = vpow.pop %v483
        %v485 = vmul.f32 %v456, 1.442695
        %v486 = vpow.pop %v485
        %v487 = vmul.f32 %v457, 1.442695
        %v488 = vpow.pop %v487
        %v489 = vmul.f32 %v458, 1.442695
        %v490 = vpow.pop %v489
        %491 = vadd.xlane.f32.xlu0 %v460
        %v492 = vpop.xlane.xlu0 %491
        %493 = vadd.xlane.f32.xlu0 %v462
        %v494 = vpop.xlane.xlu0 %493
        %495 = vadd.xlane.f32.xlu0 %v464
        %v496 = vpop.xlane.xlu0 %495
        %497 = vadd.xlane.f32.xlu0 %v466
        %v498 = vpop.xlane.xlu0 %497
        %499 = vadd.xlane.f32.xlu0 %v468
        %v500 = vpop.xlane.xlu0 %499
        %501 = vadd.xlane.f32.xlu0 %v470
        %v502 = vpop.xlane.xlu0 %501
        %503 = vadd.xlane.f32.xlu0 %v472
        %v504 = vpop.xlane.xlu0 %503
        %505 = vadd.xlane.f32.xlu0 %v474
        %v506 = vpop.xlane.xlu0 %505
        %507 = vadd.xlane.f32.xlu0 %v476
        %v508 = vpop.xlane.xlu0 %507
        %509 = vadd.xlane.f32.xlu0 %v478
        %v510 = vpop.xlane.xlu0 %509
        %511 = vadd.xlane.f32.xlu0 %v480
        %v512 = vpop.xlane.xlu0 %511
        %513 = vadd.xlane.f32.xlu0 %v482
        %v514 = vpop.xlane.xlu0 %513
        %515 = vadd.xlane.f32.xlu0 %v484
        %v516 = vpop.xlane.xlu0 %515
        %517 = vadd.xlane.f32.xlu0 %v486
        %v518 = vpop.xlane.xlu0 %517
        %519 = vadd.xlane.f32.xlu0 %v488
        %v520 = vpop.xlane.xlu0 %519
        %521 = vadd.xlane.f32.xlu0 %v490
        %v522 = vpop.xlane.xlu0 %521
        %v523 = vrcp.pop %v492
        %v524 = vmul.f32 %v460, %v523
        %v525 = vrcp.pop %v494
        %v526 = vmul.f32 %v462, %v525
        %v527 = vrcp.pop %v496
        %v528 = vmul.f32 %v464, %v527
        %v529 = vrcp.pop %v498
        %v530 = vmul.f32 %v466, %v529
        %v531 = vrcp.pop %v500
        %v532 = vmul.f32 %v468, %v531
        %v533 = vrcp.pop %v502
        %v534 = vmul.f32 %v470, %v533
        %v535 = vrcp.pop %v504
        %v536 = vmul.f32 %v472, %v535
        %v537 = vrcp.pop %v506
        %v538 = vmul.f32 %v474, %v537
        %v539 = vrcp.pop %v508
        %v540 = vmul.f32 %v476, %v539
        %v541 = vrcp.pop %v510
        %v542 = vmul.f32 %v478, %v541
        %v543 = vrcp.pop %v512
        %v544 = vmul.f32 %v480, %v543
        %v545 = vrcp.pop %v514
        %v546 = vmul.f32 %v482, %v545
        %v547 = vrcp.pop %v516
        %v548 = vmul.f32 %v484, %v547
        %v549 = vrcp.pop %v518
        %v550 = vmul.f32 %v486, %v549
        %v551 = vrcp.pop %v520
        %v552 = vmul.f32 %v488, %v551
        %v553 = vrcp.pop %v522
        %v554 = vmul.f32 %v490, %v553
        %v555 = vld [vmem:[%s213] sm:$0xf]
        %v556 = vld [vmem:[%s213 + $0x4] sm:$0xf]
        %v557 = vld [vmem:[%s213 + $0x8] sm:$0xf]
        %v558 = vld [vmem:[%s213 + $0xc] sm:$0xf]
        %v559 = vld [vmem:[%s213 + $0x10] sm:$0xf]
        %v560 = vld [vmem:[%s213 + $0x14] sm:$0xf]
        %v561 = vld [vmem:[%s213 + $0x18] sm:$0xf]
        %v562 = vld [vmem:[%s213 + $0x1c] sm:$0xf]
        %v563 = vld [vmem:[%s213 + $0x20] sm:$0xf]
        %v564 = vld [vmem:[%s213 + $0x24] sm:$0xf]
        %v565 = vld [vmem:[%s213 + $0x28] sm:$0xf]
        %v566 = vld [vmem:[%s213 + $0x2c] sm:$0xf]
        %v567 = vld [vmem:[%s213 + $0x30] sm:$0xf]
        %v568 = vld [vmem:[%s213 + $0x34] sm:$0xf]
        %v569 = vld [vmem:[%s213 + $0x38] sm:$0xf]
        %v570 = vld [vmem:[%s213 + $0x3c] sm:$0xf]
        %v571 = vunpack.c.l.bf16 %v555
        %v572 = vunpack.c.l.bf16 %v556
        %v573 = vunpack.c.l.bf16 %v557
        %v574 = vunpack.c.l.bf16 %v558
        %v575 = vunpack.c.l.bf16 %v559
        %v576 = vunpack.c.l.bf16 %v560
        %v577 = vunpack.c.l.bf16 %v561
        %v578 = vunpack.c.l.bf16 %v562
        %v579 = vunpack.c.l.bf16 %v563
        %v580 = vunpack.c.l.bf16 %v564
        %v581 = vunpack.c.l.bf16 %v565
        %v582 = vunpack.c.l.bf16 %v566
        %v583 = vunpack.c.l.bf16 %v567
        %v584 = vunpack.c.l.bf16 %v568
        %v585 = vunpack.c.l.bf16 %v569
        %v586 = vunpack.c.l.bf16 %v570
        %v587 = vmul.f32 %v524, %v571
        %v588 = vmul.f32 %v526, %v572
        %v589 = vmul.f32 %v528, %v573
        %v590 = vmul.f32 %v530, %v574
        %v591 = vmul.f32 %v532, %v575
        %v592 = vmul.f32 %v534, %v576
        %v593 = vmul.f32 %v536, %v577
        %v594 = vmul.f32 %v538, %v578
        %v595 = vmul.f32 %v540, %v579
        %v596 = vmul.f32 %v542, %v580
        %v597 = vmul.f32 %v544, %v581
        %v598 = vmul.f32 %v546, %v582
        %v599 = vmul.f32 %v548, %v583
        %v600 = vmul.f32 %v550, %v584
        %v601 = vmul.f32 %v552, %v585
        %v602 = vmul.f32 %v554, %v586
        %v603 = vpack.c.bf16 %v588, %v587
        %v604 = vpack.c.bf16 %v590, %v589
        %v605 = vpack.c.bf16 %v592, %v591
        %v606 = vpack.c.bf16 %v594, %v593
        %v607 = vpack.c.bf16 %v596, %v595
        %v608 = vpack.c.bf16 %v598, %v597
        %v609 = vpack.c.bf16 %v600, %v599
        %v610 = vpack.c.bf16 %v602, %v601
        %611 = vmatprep.subr.bf16.mxu0 0
        %612 = vmatpush1.bf16.msra.mxu0 %v258
        %613 = vmatprep.subr.bf16.mxu0 0
        %614 = vmatpush1.bf16.msra.mxu0 %v259
        %615 = vmatprep.subr.bf16.mxu0 0
        %616 = vmatpush1.bf16.msra.mxu0 %v260
        %617 = vmatprep.subr.bf16.mxu0 0
        %618 = vmatpush1.bf16.msra.mxu0 %v261
        %619 = vmatprep.subr.bf16.mxu0 0
        %620 = vmatpush1.bf16.msra.mxu0 %v262
        %621 = vmatprep.subr.bf16.mxu0 0
        %622 = vmatpush1.bf16.msra.mxu0 %v263
        %623 = vmatprep.subr.bf16.mxu0 0
        %624 = vmatpush1.bf16.msra.mxu0 %v264
        %625 = vmatprep.subr.bf16.mxu0 0
        %626 = vmatpush1.bf16.msra.mxu0 %v265
        %627 = vmatprep.subr.bf16.mxu0 0
        %628 = vmatpush1.bf16.msra.mxu0 0
        %629 = vmatprep.subr.bf16.mxu0 0
        %630 = vmatpush1.bf16.msra.mxu0 0
        %631 = vmatprep.subr.bf16.mxu0 0
        %632 = vmatpush1.bf16.msra.mxu0 0
        %633 = vmatprep.subr.bf16.mxu0 0
        %634 = vmatpush1.bf16.msra.mxu0 0
        %635 = vmatprep.subr.bf16.mxu0 0
        %636 = vmatpush1.bf16.msra.mxu0 0
        %637 = vmatprep.subr.bf16.mxu0 0
        %638 = vmatpush1.bf16.msra.mxu0 0
        %639 = vmatprep.subr.bf16.mxu0 0
        %640 = vmatpush1.bf16.msra.mxu0 0
        %641 = vmatprep.subr.bf16.mxu0 0
        %642 = vmatpush1.bf16.msra.mxu0 0
        %643 = vmatprep.mubr.bf16.mxu0 0
        %644 = vmatmul.mubr.bf16.gmra.mrb[0].mxu0 %v603
        %v645 = vpop.f32.mrb[0].mxu0
        %v646 = vadd.f32 0.0, %v645
        %v647 = vpop.f32.mrb[0].mxu0
        %v648 = vpop.f32.mrb[0].mxu0
        %v649 = vadd.f32 0.0, %v648
        %v650 = vpop.f32.mrb[0].mxu0
        %651 = vmatprep.mubr.bf16.mxu0 0
        %652 = vmatmul.mubr.bf16.gmra.mrb[0].mxu0 %v604
        %v653 = vpop.f32.mrb[0].mxu0
        %v654 = vadd.f32 0.0, %v653
        %v655 = vpop.f32.mrb[0].mxu0
        %v656 = vpop.f32.mrb[0].mxu0
        %v657 = vadd.f32 0.0, %v656
        %v658 = vpop.f32.mrb[0].mxu0
        %659 = vmatprep.mubr.bf16.mxu0 0
        %660 = vmatmul.mubr.bf16.gmra.mrb[0].mxu0 %v605
        %v661 = vpop.f32.mrb[0].mxu0
        %v662 = vadd.f32 0.0, %v661
        %v663 = vpop.f32.mrb[0].mxu0
        %v664 = vpop.f32.mrb[0].mxu0
        %v665 = vadd.f32 0.0, %v664
        %v666 = vpop.f32.mrb[0].mxu0
        %667 = vmatprep.mubr.bf16.mxu0 0
        %668 = vmatmul.mubr.bf16.gmra.mrb[0].mxu0 %v606
        %v669 = vpop.f32.mrb[0].mxu0
        %v670 = vadd.f32 0.0, %v669
        %v671 = vpop.f32.mrb[0].mxu0
        %v672 = vpop.f32.mrb[0].mxu0
        %v673 = vadd.f32 0.0, %v672
        %v674 = vpop.f32.mrb[0].mxu0
        %675 = vmatprep.mubr.bf16.mxu0 0
        %676 = vmatmul.mubr.bf16.gmra.mrb[0].mxu0 %v607
        %v677 = vpop.f32.mrb[0].mxu0
        %v678 = vadd.f32 0.0, %v677
        %v679 = vpop.f32.mrb[0].mxu0
        %v680 = vpop.f32.mrb[0].mxu0
        %v681 = vadd.f32 0.0, %v680
        %v682 = vpop.f32.mrb[0].mxu0
        %683 = vmatprep.mubr.bf16.mxu0 0
        %684 = vmatmul.mubr.bf16.gmra.mrb[0].mxu0 %v608
        %v685 = vpop.f32.mrb[0].mxu0
        %v686 = vadd.f32 0.0, %v685
        %v687 = vpop.f32.mrb[0].mxu0
        %v688 = vpop.f32.mrb[0].mxu0
        %v689 = vadd.f32 0.0, %v688
        %v690 = vpop.f32.mrb[0].mxu0
        %691 = vmatprep.mubr.bf16.mxu0 0
        %692 = vmatmul.mubr.bf16.gmra.mrb[0].mxu0 %v609
        %v693 = vpop.f32.mrb[0].mxu0
        %v694 = vadd.f32 0.0, %v693
        %v695 = vpop.f32.mrb[0].mxu0
        %v696 = vpop.f32.mrb[0].mxu0
        %v697 = vadd.f32 0.0, %v696
        %v698 = vpop.f32.mrb[0].mxu0
        %699 = vmatprep.mubr.bf16.mxu0 0
        %700 = vmatmul.mubr.bf16.gmra.mrb[0].mxu0 %v610
        %v701 = vpop.f32.mrb[0].mxu0
        %v702 = vadd.f32 0.0, %v701
        %v703 = vpop.f32.mrb[0].mxu0
        %v704 = vpop.f32.mrb[0].mxu0
        %v705 = vadd.f32 0.0, %v704
        %v706 = vpop.f32.mrb[0].mxu0
        %707 = vdwg.mxu0
        %708 = vst [vmem:[%s240] sm:$0xff] %v646
        %709 = vst [vmem:[%s240 + $0x8] sm:$0xff] %v649
        %710 = vst [vmem:[%s240 + $0x10] sm:$0xff] %v654
        %711 = vst [vmem:[%s240 + $0x18] sm:$0xff] %v657
        %712 = vst [vmem:[%s240 + $0x20] sm:$0xff] %v662
        %713 = vst [vmem:[%s240 + $0x28] sm:$0xff] %v665
        %714 = vst [vmem:[%s240 + $0x30] sm:$0xff] %v670
        %715 = vst [vmem:[%s240 + $0x38] sm:$0xff] %v673
        %716 = vst [vmem:[%s240 + $0x40] sm:$0xff] %v678
        %717 = vst [vmem:[%s240 + $0x48] sm:$0xff] %v681
        %718 = vst [vmem:[%s240 + $0x50] sm:$0xff] %v686
        %719 = vst [vmem:[%s240 + $0x58] sm:$0xff] %v689
        %720 = vst [vmem:[%s240 + $0x60] sm:$0xff] %v694
        %721 = vst [vmem:[%s240 + $0x68] sm:$0xff] %v697
        %722 = vst [vmem:[%s240 + $0x70] sm:$0xff] %v702
        %723 = vst [vmem:[%s240 + $0x78] sm:$0xff] %v705
        %s724 = sand.u32 %s102, 1
        %s725 = scalar_lea.sflag [#allocation4], %s724
        %s726 = sand.u32 %s102, 1
        %s727 = smul.addr %s726, 128
        %s728 = scalar_lea.vmem [#allocation8], %s727
        // Predicated region
        $region45: #{tpu_custom_call.1} parent=31 // pred_check
          %p729 = pneg %p112
        $region46: #{tpu_custom_call.1} parent=31 // pred_check_branch
          %731 = sbr.rel (%p729) target = $region48
        $region47: #{tpu_custom_call.1} parent=31 // pred_region
          %s733 = ssub.s32 2048, 2048
          %734 = vsyncadd %s725, %s733
          %s735 = smul.addr %s21, 16
          %s736 = smul.addr %s735, 128
          %s737 = scalar_lea.hbm %s3, %s736
          %s738 = sshll.u32 %s728, 4
          %s739 = int_to_ptr.vmem [resolvable:$true] %s738
          %744 = dma.vmem_to_hbm [thread:$0]  %s739, 2048, %s737, %s725, 128, 128, 8
        $region48: #{tpu_custom_call.1} parent=31 // pred_fallthru
          _
      $region32: #{tpu_custom_call.1} parent=5 // pred_fallthru
        _
      %p745 = scmp.le.s32.totalorder 2, %s16
      // Predicated region
      $region49: #{tpu_custom_call.1} parent=5 // pred_check
        %p746 = pneg %p745
      $region50: #{tpu_custom_call.1} parent=5 // pred_check_branch
        %748 = sbr.rel (%p746) target = $region52
      $region51: #{tpu_custom_call.1} parent=5 // pred_region
        %s749 = ssub.s32 %s16, 2
        // Predicated region
        $region53: #{tpu_custom_call.1} parent=51 // pred_check
          %p750 = pneg %p118
        $region54: #{tpu_custom_call.1} parent=51 // pred_check_branch
          %752 = sbr.rel (%p750) target = $region56
        $region55: #{tpu_custom_call.1} parent=51 // pred_region
          %s753 = sand.u32 %s103, 1
          %s754 = scalar_lea.sflag [#allocation4], %s753
          %s755 = sand.u32 %s103, 1
          %s756 = smul.addr %s755, 128
          %s757 = scalar_lea.vmem [#allocation8], %s756
          %758 = dma.done %s754, 2048
        $region56: #{tpu_custom_call.1} parent=51 // pred_fallthru
          _
      $region52: #{tpu_custom_call.1} parent=5 // pred_fallthru
        _
    $region6: #{tpu_custom_call.1} parent=1 // loop_footer
      %s20 = sadd.s32 1, %s16
    $region7: #{tpu_custom_call.1} parent=1 // loop_footer_branch
      %15 = sbr.rel target = $region3
    $region8: #{tpu_custom_call.1} parent=1 // loop_exit
      _
    %759 = vsyncpa [#allocation3], 1
    %s760 = scalar_lea.sflag [#allocation3], 1
    %761 = vsyncpa %s760, 1
    %762 = vsyncpa [#allocation6], 1
    %763 = vsyncpa [#allocation4], 1
    %s764 = scalar_lea.sflag [#allocation4], 1
    %765 = vsyncpa %s764, 1

</llo_original>
